<compile_context>
chip_gen: v5e
topology: v5e:2x2
jax: 0.10.0
libtpu: 0.0.40
codegen_flags: <defaults>
</compile_context>

<pallas_src>
import functools

import jax
import jax.numpy as jnp
from jax import lax
from jax.experimental import pallas as pl
from jax.experimental.pallas import tpu as pltpu


def _temporal_block_kernel(*refs, K, dilation, L, B, Cin, Cout, has_downsample):
    # Layouts (time on lanes):
    #   x_ref  : (B, Cin,  L)        w1_ref : (Cout, K*Cin)   b1_ref : (Cout, 1)
    #   o_ref  : (B, Cout, L)        w2_ref : (Cout, K*Cout)  b2_ref : (Cout, 1)
    #   wd_ref : (Cout, Cin)  bd_ref : (Cout, 1)   (only if has_downsample)
    if has_downsample:
        x_ref, w1_ref, b1_ref, w2_ref, b2_ref, wd_ref, bd_ref, o_ref = refs
    else:
        x_ref, w1_ref, b1_ref, w2_ref, b2_ref, o_ref = refs
        wd_ref = bd_ref = None

    x = x_ref[...]                                    # (B, Cin, L)
    cdt = x.dtype

    def causal_taps(v, C):
        # Build the (B, K*C, L) im2col block: tap k is v shifted right (causally)
        # by s = (K-1-k)*dilation lanes with zero fill, done on the live value via
        # pltpu.roll (XLU) + an iota mask (VPU) -- no padded scratch round trip.
        t_idx = lax.broadcasted_iota(jnp.int32, (B, C, L), 2)
        parts = []
        for k in range(K):
            s = (K - 1 - k) * dilation
            if s == 0:
                parts.append(v)
            else:
                shifted = pltpu.roll(v, shift=s, axis=2)
                parts.append(jnp.where(t_idx >= s, shifted, jnp.zeros_like(shifted)))
        return parts[0] if K == 1 else jnp.concatenate(parts, axis=1)

    def conv_bias(v, C, w_ref, b_ref):
        # One batched MXU matmul: (B, Cout, K*C) x (B, K*C, L) -> (B, Cout, L) f32.
        im = causal_taps(v, C)
        wb = jnp.broadcast_to(w_ref[...][None], (B, Cout, K * C))
        y = lax.dot_general(wb, im, (((2,), (1,)), ((0,), (0,))),
                            preferred_element_type=jnp.float32)
        return y + b_ref[...][None]                   # (1, Cout, 1) broadcast, f32

    # conv1 -> chomp -> ReLU (dropout = identity), then conv2 -> chomp -> ReLU.
    h1 = jnp.maximum(conv_bias(x, Cin, w1_ref, b1_ref), 0.0)           # f32
    h2 = jnp.maximum(conv_bias(h1.astype(cdt), Cout, w2_ref, b2_ref), 0.0)

    # Residual branch (1x1 conv iff channel counts differ), final ReLU, one store.
    if has_downsample:
        wdb = jnp.broadcast_to(wd_ref[...][None], (B, Cout, Cin))
        res = lax.dot_general(wdb, x, (((2,), (1,)), ((0,), (0,))),
                              preferred_element_type=jnp.float32)
        res = res + bd_ref[...][None]
    else:
        res = x.astype(jnp.float32)

    o_ref[...] = jnp.maximum(h2 + res, 0.0).astype(o_ref.dtype)


def temporal_block_forward(x_ncl, params, *, kernel_size, dilation, padding,
                           batch_tile=None, compute_dtype=jnp.float32,
                           vmem_budget_bytes=24 * 1024 * 1024):
    """x_ncl: (N, Cin, L).  Returns (N, Cout, L) in x_ncl.dtype.  No transposes."""
    N, Cin, L = x_ncl.shape
    w1, b1, w2, b2, wd, bd = params
    K = kernel_size
    Cout = w1.shape[2]
    has_downsample = (Cin != Cout)
    assert padding == (K - 1) * dilation, (
        "kernel assumes causal TCN padding: padding == (kernel_size - 1) * dilation")

    cdt = jnp.dtype(compute_dtype)

    if batch_tile is None:
        # Rough f32-equivalent per-batch-element VMEM footprint: double-buffered
        # x/out blocks + im2col + hidden/residual temporaries (sized for v7x 64MiB).
        per_b = 4 * L * (2 * Cin + 2 * Cout + K * max(Cin, Cout) + 4 * Cout)
        batch_tile = max(1, min(N, vmem_budget_bytes // max(per_b, 1)))
        if N >= 2:  # keep >= 2 grid steps so both v7x TensorCores get work
            batch_tile = min(batch_tile, pl.cdiv(N, 2))
    n_tiles = pl.cdiv(N, batch_tile)
    n_padded = n_tiles * batch_tile

    x = x_ncl.astype(cdt)
    if n_padded != N:
        x = jnp.pad(x, ((0, n_padded - N), (0, 0), (0, 0)))  # padded rows sliced off

    # Pre-flatten conv weights: im2col row k*C + c pairs with torch tap k, channel c.
    w1_flat = jnp.transpose(w1.reshape(K * Cin, Cout)).astype(cdt)    # (Cout, K*Cin)
    w2_flat = jnp.transpose(w2.reshape(K * Cout, Cout)).astype(cdt)   # (Cout, K*Cout)
    b1c = b1.reshape(Cout, 1).astype(jnp.float32)
    b2c = b2.reshape(Cout, 1).astype(jnp.float32)

    kernel = functools.partial(
        _temporal_block_kernel, K=K, dilation=dilation, L=L,
        B=batch_tile, Cin=Cin, Cout=Cout, has_downsample=has_downsample)

    in_specs = [
        pl.BlockSpec((batch_tile, Cin, L), lambda n: (n, 0, 0)),      # x
        pl.BlockSpec((Cout, K * Cin), lambda n: (0, 0)),              # w1 (flat)
        pl.BlockSpec((Cout, 1), lambda n: (0, 0)),                    # b1
        pl.BlockSpec((Cout, K * Cout), lambda n: (0, 0)),             # w2 (flat)
        pl.BlockSpec((Cout, 1), lambda n: (0, 0)),                    # b2
    ]
    args = [x, w1_flat, b1c, w2_flat, b2c]
    if has_downsample:
        wd_t = jnp.transpose(wd).astype(cdt)                          # (Cout, Cin)
        bdc = bd.reshape(Cout, 1).astype(jnp.float32)
        in_specs += [pl.BlockSpec((Cout, Cin), lambda n: (0, 0)),     # wd
                     pl.BlockSpec((Cout, 1), lambda n: (0, 0))]       # bd
        args += [wd_t, bdc]

    out = pl.pallas_call(
        kernel,
        out_shape=jax.ShapeDtypeStruct((n_padded, Cout, L), cdt),
        grid_spec=pltpu.PrefetchScalarGridSpec(
            num_scalar_prefetch=0,
            grid=(n_tiles,),
            in_specs=in_specs,
            out_specs=pl.BlockSpec((batch_tile, Cout, L), lambda n: (n, 0, 0)),
        ),
        compiler_params=pltpu.CompilerParams(
            dimension_semantics=("parallel",),
            vmem_limit_bytes=64 * 1024 * 1024),
    )(*args)

    return out[:N].astype(x_ncl.dtype)


def reference_forward(x_ncl, params, *, kernel_size, dilation, padding):
    """Pure-JAX reference matching PyTorch TemporalBlock.forward (eval mode)."""
    w1, b1, w2, b2, wd, bd = params
    dn = ("NCH", "OIH", "NCH")

    def conv1d(x, w_kio, b, dil, pad):
        # w_kio: (K, Cin, Cout) -> torch layout (Cout, Cin, K)
        w_oik = jnp.transpose(w_kio, (2, 1, 0))
        y = lax.conv_general_dilated(
            x, w_oik, window_strides=(1,), padding=((pad, pad),),
            rhs_dilation=(dil,), dimension_numbers=dn)
        return y + b.reshape(1, -1, 1)

    h = conv1d(x_ncl, w1, b1, dilation, padding)
    h = h[:, :, :-padding]                       # Chomp1d
    h = jnp.maximum(h, 0.0)                      # ReLU (dropout = identity)
    h = conv1d(h, w2, b2, dilation, padding)
    h = h[:, :, :-padding]
    h = jnp.maximum(h, 0.0)
    Cin, Cout = w1.shape[1], w1.shape[2]
    if Cin != Cout:
        res = jnp.einsum("ncl,co->nol", x_ncl, wd) + bd.reshape(1, -1, 1)
    else:
        res = x_ncl
    return jnp.maximum(h + res, 0.0)


if __name__ == "__main__":
    # TemporalBlock('c', n_inputs=4, n_outputs=8, kernel_size=3, stride=1,
    #               dilation=2, padding=(3-1)*2=4), sequence length 128
    # (L=128 keeps the lane axis dense; batch 4 -> 2 grid steps of 2).
    N, Cin, Cout, L = 4, 4, 8, 128
    K, dilation = 3, 2
    padding = (K - 1) * dilation

    key = jax.random.PRNGKey(0)
    k0, k1, k2, k3, k4, k5, k6 = jax.random.split(key, 7)

    x = jax.random.normal(k0, (N, Cin, L), dtype=jnp.float32)

    # Deterministic parameter init (shapes match the nn.Conv1d modules).
    w1 = 0.3 * jax.random.normal(k1, (K, Cin, Cout), dtype=jnp.float32)   # conv1
    b1 = 0.1 * jax.random.normal(k2, (1, Cout), dtype=jnp.float32)
    w2 = 0.3 * jax.random.normal(k3, (K, Cout, Cout), dtype=jnp.float32)  # conv2
    b2 = 0.1 * jax.random.normal(k4, (1, Cout), dtype=jnp.float32)
    wd = 0.3 * jax.random.normal(k5, (Cin, Cout), dtype=jnp.float32)      # 1x1 downsample
    bd = 0.1 * jax.random.normal(k6, (1, Cout), dtype=jnp.float32)
    params = (w1, b1, w2, b2, wd, bd)

    out = temporal_block_forward(
        x, params, kernel_size=K, dilation=dilation, padding=padding)
    out = jax.block_until_ready(out)

    ref = reference_forward(
        x, params, kernel_size=K, dilation=dilation, padding=padding)
    ref = jax.block_until_ready(ref)

    assert out.shape == (N, Cout, L), out.shape
    err = float(jnp.max(jnp.abs(out - ref)))
    assert jnp.allclose(out, ref, atol=1e-4, rtol=1e-4), err

    print("KERNEL_OK")
</pallas_src>

<mosaic_0001>
module attributes {stable_mosaic.version = 11 : i64} {
  func.func @_temporal_block_kernel(%arg0: i32, %arg1: memref<2x4x128xf32, #tpu.memory_space<vmem>>, %arg2: memref<8x12xf32, #tpu.memory_space<vmem>>, %arg3: memref<8x1xf32, #tpu.memory_space<vmem>>, %arg4: memref<8x24xf32, #tpu.memory_space<vmem>>, %arg5: memref<8x1xf32, #tpu.memory_space<vmem>>, %arg6: memref<8x4xf32, #tpu.memory_space<vmem>>, %arg7: memref<8x1xf32, #tpu.memory_space<vmem>>, %arg8: memref<2x8x128xf32, #tpu.memory_space<vmem>>) attributes {dimension_semantics = [#tpu.dimension_semantics<parallel>], iteration_bounds = array<i64: 2>, scalar_prefetch = 0 : i64, scratch_operands = 0 : i64, tpu.core_type = #tpu.core_type<tc>, window_params = [{transform_indices = @transform_0, window_bounds = array<i64: 2, 4, 128>}, {pipeline_mode = #tpu.pipeline_mode<synchronous>, transform_indices = @transform_1, window_bounds = array<i64: 8, 12>}, {pipeline_mode = #tpu.pipeline_mode<synchronous>, transform_indices = @transform_2, window_bounds = array<i64: 8, 1>}, {pipeline_mode = #tpu.pipeline_mode<synchronous>, transform_indices = @transform_3, window_bounds = array<i64: 8, 24>}, {pipeline_mode = #tpu.pipeline_mode<synchronous>, transform_indices = @transform_4, window_bounds = array<i64: 8, 1>}, {pipeline_mode = #tpu.pipeline_mode<synchronous>, transform_indices = @transform_5, window_bounds = array<i64: 8, 4>}, {pipeline_mode = #tpu.pipeline_mode<synchronous>, transform_indices = @transform_6, window_bounds = array<i64: 8, 1>}, {transform_indices = @transform_7, window_bounds = array<i64: 2, 8, 128>}]} {
    %c0 = arith.constant 0 : index
    %c0_0 = arith.constant 0 : index
    %c0_1 = arith.constant 0 : index
    %0 = vector.load %arg1[%c0, %c0_0, %c0_1] : memref<2x4x128xf32, #tpu.memory_space<vmem>>, vector<2x4x128xf32>
    %1 = tpu.iota {dimensions = array<i32: 2>} : vector<2x4x128xi32>
    %c4_i32 = arith.constant 4 : i32
    %2 = tpu.dynamic_rotate %0 by %c4_i32 dim 2 : vector<2x4x128xf32>, i32 -> vector<2x4x128xf32>
    %c4_i32_2 = arith.constant 4 : i32
    %3 = vector.broadcast %c4_i32_2 : i32 to vector<2x4x128xi32>
    %4 = arith.cmpi sge, %1, %3 : vector<2x4x128xi32>
    %cst = arith.constant 0.000000e+00 : f32
    %5 = vector.broadcast %cst : f32 to vector<2x4x128xf32>
    %6 = arith.select %4, %2, %5 : vector<2x4x128xi1>, vector<2x4x128xf32>
    %c2_i32 = arith.constant 2 : i32
    %7 = tpu.dynamic_rotate %0 by %c2_i32 dim 2 : vector<2x4x128xf32>, i32 -> vector<2x4x128xf32>
    %c2_i32_3 = arith.constant 2 : i32
    %8 = vector.broadcast %c2_i32_3 : i32 to vector<2x4x128xi32>
    %9 = arith.cmpi sge, %1, %8 : vector<2x4x128xi32>
    %cst_4 = arith.constant 0.000000e+00 : f32
    %10 = vector.broadcast %cst_4 : f32 to vector<2x4x128xf32>
    %11 = arith.select %9, %7, %10 : vector<2x4x128xi1>, vector<2x4x128xf32>
    %12 = tpu.concatenate %6, %11, %0 in 1 : vector<2x4x128xf32>, vector<2x4x128xf32>, vector<2x4x128xf32> -> vector<2x12x128xf32>
    %c0_5 = arith.constant 0 : index
    %c0_6 = arith.constant 0 : index
    %13 = vector.load %arg2[%c0_5, %c0_6] : memref<8x12xf32, #tpu.memory_space<vmem>>, vector<8x12xf32>
    %14 = vector.shape_cast %13 : vector<8x12xf32> to vector<1x8x12xf32>
    %15 = vector.shape_cast %14 : vector<1x8x12xf32> to vector<1x8x12xf32>
    %16 = vector.broadcast %15 : vector<1x8x12xf32> to vector<2x8x12xf32>
    %cst_7 = arith.constant dense<0.000000e+00> : vector<2x8x128xf32>
    %17 = tpu.matmul %16, %12, %cst_7 {dimension_numbers = #tpu.dot_dimension_numbers<[2], [1], [1], [2], [0, 0, 0, 1, 1, 2], [0], [0]>} : vector<2x8x12xf32>, vector<2x12x128xf32>, vector<2x8x128xf32> -> vector<2x8x128xf32>
    %c0_8 = arith.constant 0 : index
    %c0_9 = arith.constant 0 : index
    %18 = vector.load %arg3[%c0_8, %c0_9] : memref<8x1xf32, #tpu.memory_space<vmem>>, vector<8x1xf32>
    %19 = vector.shape_cast %18 : vector<8x1xf32> to vector<1x8x1xf32>
    %20 = vector.broadcast %19 : vector<1x8x1xf32> to vector<2x8x128xf32>
    %21 = arith.addf %17, %20 : vector<2x8x128xf32>
    %cst_10 = arith.constant 0.000000e+00 : f32
    %22 = vector.broadcast %cst_10 : f32 to vector<2x8x128xf32>
    %23 = arith.maximumf %21, %22 : vector<2x8x128xf32>
    %24 = tpu.iota {dimensions = array<i32: 2>} : vector<2x8x128xi32>
    %c4_i32_11 = arith.constant 4 : i32
    %25 = tpu.dynamic_rotate %23 by %c4_i32_11 dim 2 : vector<2x8x128xf32>, i32 -> vector<2x8x128xf32>
    %c4_i32_12 = arith.constant 4 : i32
    %26 = vector.broadcast %c4_i32_12 : i32 to vector<2x8x128xi32>
    %27 = arith.cmpi sge, %24, %26 : vector<2x8x128xi32>
    %cst_13 = arith.constant 0.000000e+00 : f32
    %28 = vector.broadcast %cst_13 : f32 to vector<2x8x128xf32>
    %29 = arith.select %27, %25, %28 : vector<2x8x128xi1>, vector<2x8x128xf32>
    %c2_i32_14 = arith.constant 2 : i32
    %30 = tpu.dynamic_rotate %23 by %c2_i32_14 dim 2 : vector<2x8x128xf32>, i32 -> vector<2x8x128xf32>
    %c2_i32_15 = arith.constant 2 : i32
    %31 = vector.broadcast %c2_i32_15 : i32 to vector<2x8x128xi32>
    %32 = arith.cmpi sge, %24, %31 : vector<2x8x128xi32>
    %cst_16 = arith.constant 0.000000e+00 : f32
    %33 = vector.broadcast %cst_16 : f32 to vector<2x8x128xf32>
    %34 = arith.select %32, %30, %33 : vector<2x8x128xi1>, vector<2x8x128xf32>
    %35 = tpu.concatenate %29, %34, %23 in 1 : vector<2x8x128xf32>, vector<2x8x128xf32>, vector<2x8x128xf32> -> vector<2x24x128xf32>
    %c0_17 = arith.constant 0 : index
    %c0_18 = arith.constant 0 : index
    %36 = vector.load %arg4[%c0_17, %c0_18] : memref<8x24xf32, #tpu.memory_space<vmem>>, vector<8x24xf32>
    %37 = vector.shape_cast %36 : vector<8x24xf32> to vector<1x8x24xf32>
    %38 = vector.shape_cast %37 : vector<1x8x24xf32> to vector<1x8x24xf32>
    %39 = vector.broadcast %38 : vector<1x8x24xf32> to vector<2x8x24xf32>
    %cst_19 = arith.constant dense<0.000000e+00> : vector<2x8x128xf32>
    %40 = tpu.matmul %39, %35, %cst_19 {dimension_numbers = #tpu.dot_dimension_numbers<[2], [1], [1], [2], [0, 0, 0, 1, 1, 2], [0], [0]>} : vector<2x8x24xf32>, vector<2x24x128xf32>, vector<2x8x128xf32> -> vector<2x8x128xf32>
    %c0_20 = arith.constant 0 : index
    %c0_21 = arith.constant 0 : index
    %41 = vector.load %arg5[%c0_20, %c0_21] : memref<8x1xf32, #tpu.memory_space<vmem>>, vector<8x1xf32>
    %42 = vector.shape_cast %41 : vector<8x1xf32> to vector<1x8x1xf32>
    %43 = vector.broadcast %42 : vector<1x8x1xf32> to vector<2x8x128xf32>
    %44 = arith.addf %40, %43 : vector<2x8x128xf32>
    %cst_22 = arith.constant 0.000000e+00 : f32
    %45 = vector.broadcast %cst_22 : f32 to vector<2x8x128xf32>
    %46 = arith.maximumf %44, %45 : vector<2x8x128xf32>
    %c0_23 = arith.constant 0 : index
    %c0_24 = arith.constant 0 : index
    %47 = vector.load %arg6[%c0_23, %c0_24] : memref<8x4xf32, #tpu.memory_space<vmem>>, vector<8x4xf32>
    %48 = vector.shape_cast %47 : vector<8x4xf32> to vector<1x8x4xf32>
    %49 = vector.shape_cast %48 : vector<1x8x4xf32> to vector<1x8x4xf32>
    %50 = vector.broadcast %49 : vector<1x8x4xf32> to vector<2x8x4xf32>
    %cst_25 = arith.constant dense<0.000000e+00> : vector<2x8x128xf32>
    %51 = tpu.matmul %50, %0, %cst_25 {dimension_numbers = #tpu.dot_dimension_numbers<[2], [1], [1], [2], [0, 0, 0, 1, 1, 2], [0], [0]>} : vector<2x8x4xf32>, vector<2x4x128xf32>, vector<2x8x128xf32> -> vector<2x8x128xf32>
    %c0_26 = arith.constant 0 : index
    %c0_27 = arith.constant 0 : index
    %52 = vector.load %arg7[%c0_26, %c0_27] : memref<8x1xf32, #tpu.memory_space<vmem>>, vector<8x1xf32>
    %53 = vector.shape_cast %52 : vector<8x1xf32> to vector<1x8x1xf32>
    %54 = vector.broadcast %53 : vector<1x8x1xf32> to vector<2x8x128xf32>
    %55 = arith.addf %51, %54 : vector<2x8x128xf32>
    %56 = arith.addf %46, %55 : vector<2x8x128xf32>
    %cst_28 = arith.constant 0.000000e+00 : f32
    %57 = vector.broadcast %cst_28 : f32 to vector<2x8x128xf32>
    %58 = arith.maximumf %56, %57 : vector<2x8x128xf32>
    %c0_29 = arith.constant 0 : index
    %c0_30 = arith.constant 0 : index
    %c0_31 = arith.constant 0 : index
    %59 = vector.load %arg8[%c0_29, %c0_30, %c0_31] : memref<2x8x128xf32, #tpu.memory_space<vmem>>, vector<2x8x128xf32>
    tpu.vector_store %arg8[%c0_29, %c0_30, %c0_31], %58 {strides = array<i32>} : memref<2x8x128xf32, #tpu.memory_space<vmem>>, vector<2x8x128xf32>,
    return
  }
  func.func @transform_0(%arg0: i32) -> (i32, i32, i32) {
    %c0_i32 = arith.constant 0 : i32
    %c0_i32_0 = arith.constant 0 : i32
    %c0_i32_1 = arith.constant 0 : i32
    return %arg0, %c0_i32, %c0_i32_0 : i32, i32, i32
  }
  func.func @transform_1(%arg0: i32) -> (i32, i32) {
    %c0_i32 = arith.constant 0 : i32
    %c0_i32_0 = arith.constant 0 : i32
    %c0_i32_1 = arith.constant 0 : i32
    return %c0_i32, %c0_i32_0 : i32, i32
  }
  func.func @transform_2(%arg0: i32) -> (i32, i32) {
    %c0_i32 = arith.constant 0 : i32
    %c0_i32_0 = arith.constant 0 : i32
    %c0_i32_1 = arith.constant 0 : i32
    return %c0_i32, %c0_i32_0 : i32, i32
  }
  func.func @transform_3(%arg0: i32) -> (i32, i32) {
    %c0_i32 = arith.constant 0 : i32
    %c0_i32_0 = arith.constant 0 : i32
    %c0_i32_1 = arith.constant 0 : i32
    return %c0_i32, %c0_i32_0 : i32, i32
  }
  func.func @transform_4(%arg0: i32) -> (i32, i32) {
    %c0_i32 = arith.constant 0 : i32
    %c0_i32_0 = arith.constant 0 : i32
    %c0_i32_1 = arith.constant 0 : i32
    return %c0_i32, %c0_i32_0 : i32, i32
  }
  func.func @transform_5(%arg0: i32) -> (i32, i32) {
    %c0_i32 = arith.constant 0 : i32
    %c0_i32_0 = arith.constant 0 : i32
    %c0_i32_1 = arith.constant 0 : i32
    return %c0_i32, %c0_i32_0 : i32, i32
  }
  func.func @transform_6(%arg0: i32) -> (i32, i32) {
    %c0_i32 = arith.constant 0 : i32
    %c0_i32_0 = arith.constant 0 : i32
    %c0_i32_1 = arith.constant 0 : i32
    return %c0_i32, %c0_i32_0 : i32, i32
  }
  func.func @transform_7(%arg0: i32) -> (i32, i32, i32) {
    %c0_i32 = arith.constant 0 : i32
    %c0_i32_0 = arith.constant 0 : i32
    %c0_i32_1 = arith.constant 0 : i32
    return %arg0, %c0_i32, %c0_i32_0 : i32, i32, i32
  }
}

</mosaic_0001>

<llo_original>
// kernel: tpu_custom_call.1
$region0: #{tpu_custom_call.1}
  #allocation0 [shape = 'u32[]', space=smem, size = 0x4, offset = 0x4, fixed_abs, tag = 'smem constant byte address 0x4 - core index']
  #allocation1 [shape = 'u32[72,128]{1,0:T(1,128)}', space=vmem, size = 0x9000, scoped, tag = 'internal scratch']
  %s0 = inlined_call_operand.vmem [shape: f32[4,4,128], index: 0, kind: input, shape index: {}]
  %s1 = inlined_call_operand.vmem [shape: f32[8,12], index: 1, kind: input, shape index: {}]
  %s2 = inlined_call_operand.vmem [shape: f32[8,1], index: 2, kind: input, shape index: {}]
  %s3 = inlined_call_operand.vmem [shape: f32[8,24], index: 3, kind: input, shape index: {}]
  %s4 = inlined_call_operand.vmem [shape: f32[8,1], index: 4, kind: input, shape index: {}]
  %s5 = inlined_call_operand.vmem [shape: f32[8,4], index: 5, kind: input, shape index: {}]
  %s6 = inlined_call_operand.vmem [shape: f32[8,1], index: 6, kind: input, shape index: {}]
  %s7 = inlined_call_operand.hbm [shape: f32[4,8,128], index: 7, kind: output, shape index: {}]
  %s8 = sld [smem:[#allocation0]]
  $region61: #{tpu_custom_call.1} parent=0
    _
  %s10 = ssub.s32 1, %s8
  %s11 = scalar_select 0, %s10, %s8
  $region1: #{tpu_custom_call.1} parent=0
    #allocation2 [shape = 'u8[16384]{0}', space=vmem, size = 0x4000, scoped, tag = 'output window, operand 0']
    #allocation3 [shape = 's32[2]{0}', space=sflag, size = 0x8, scoped, tag = 'scoped memory for tpu_custom_call.1']
    %12 = vsyncpa [#allocation3], 0
    %s13 = scalar_lea.sflag [#allocation3], 1
    %14 = vsyncpa %s13, 0
    loop: start=0, step=1, limit=4
    $region2: #{tpu_custom_call.1} parent=1 // loop_pre_header
      _
    $region3: #{tpu_custom_call.1} parent=1 // loop_header
      %s16 = sphi 0, %s20
      %p17 = scmp.ge.s32.totalorder %s16, 4
      %s26 = sphi 0, %s28
      %s29 = sphi 0, %s26
      %s30 = sphi 0, %s29
      %s46 = sphi 0, %s30
      %s50 = sphi 0, %s50
      %s52 = sphi 0, %s50
      %s53 = sphi 0, %s52
      %s67 = sphi 0, %s53
      %s71 = sphi 0, %s71
      %s73 = sphi 0, %s71
      %s74 = sphi 0, %s73
      %s88 = sphi 0, %s74
      %s92 = sphi 0, %s92
      %s94 = sphi 0, %s92
      %s95 = sphi 0, %s94
      %s109 = sphi 0, %s95
      %s113 = sphi 0, %s113
      %s115 = sphi 0, %s113
      %s116 = sphi 0, %s115
      %s130 = sphi 0, %s116
      %s134 = sphi 0, %s134
      %s136 = sphi 0, %s134
      %s137 = sphi 0, %s136
      %s151 = sphi 0, %s137
      %s155 = sphi 0, %s155
      %s157 = sphi 0, %s155
      %s158 = sphi 0, %s157
      %s172 = sphi 0, %s158
      %s178 = sphi 0, %s180
      %s181 = sphi 0, %s178
      %s182 = sphi 0, %s181
      %s198 = sphi 0, %s182
    $region4: #{tpu_custom_call.1} parent=1 // loop_header_branch
      %19 = sbr.rel (%p17) target = $region8
    $region5: #{tpu_custom_call.1} parent=1 // loop_body
      %s21 = ssub.s32 %s16, 1
      %s22 = ssub.s32 %s16, 2
      %s23 = sadd.s32 %s16, 1
      %s24 = ssub.s32 %s16, %s23
      %p25 = scmp.eq.s32.totalorder %s24, 0
      %s27 = sadd.s32 %s26, 1
      %s28 = scalar_select %p25, %s26, %s27
      %p31 = pneg %p25
      %p32 = scmp.eq.s32.totalorder %s16, 1
      %p33 = por %p31, %p32
      %p34 = scmp.ne.s32.totalorder %s26, %s29
      %p35 = scmp.eq.s32.totalorder %s16, 0
      %p36 = por %p34, %p35
      %p37 = scmp.ne.s32.totalorder %s26, %s29
      %p38 = scmp.eq.s32.totalorder %s21, 1
      %p39 = por %p37, %p38
      %p40 = scmp.ne.s32.totalorder %s29, %s30
      %p41 = scmp.eq.s32.totalorder %s21, 0
      %p42 = por %p40, %p41
      %p43 = scmp.ne.s32.totalorder %s29, %s30
      %p44 = scmp.eq.s32.totalorder %s22, 1
      %p45 = por %p43, %p44
      %p47 = scmp.ne.s32.totalorder %s30, %s46
      %p48 = scmp.eq.s32.totalorder %s22, 0
      %p49 = por %p47, %p48
      %s51 = sadd.s32 %s50, 1
      %p54 = scmp.eq.s32.totalorder %s16, 1
      %p55 = scmp.ne.s32.totalorder %s50, %s52
      %p56 = scmp.eq.s32.totalorder %s16, 0
      %p57 = por %p55, %p56
      %p58 = scmp.ne.s32.totalorder %s50, %s52
      %p59 = scmp.eq.s32.totalorder %s21, 1
      %p60 = por %p58, %p59
      %p61 = scmp.ne.s32.totalorder %s52, %s53
      %p62 = scmp.eq.s32.totalorder %s21, 0
      %p63 = por %p61, %p62
      %p64 = scmp.ne.s32.totalorder %s52, %s53
      %p65 = scmp.eq.s32.totalorder %s22, 1
      %p66 = por %p64, %p65
      %p68 = scmp.ne.s32.totalorder %s53, %s67
      %p69 = scmp.eq.s32.totalorder %s22, 0
      %p70 = por %p68, %p69
      %s72 = sadd.s32 %s71, 1
      %p75 = scmp.eq.s32.totalorder %s16, 1
      %p76 = scmp.ne.s32.totalorder %s71, %s73
      %p77 = scmp.eq.s32.totalorder %s16, 0
      %p78 = por %p76, %p77
      %p79 = scmp.ne.s32.totalorder %s71, %s73
      %p80 = scmp.eq.s32.totalorder %s21, 1
      %p81 = por %p79, %p80
      %p82 = scmp.ne.s32.totalorder %s73, %s74
      %p83 = scmp.eq.s32.totalorder %s21, 0
      %p84 = por %p82, %p83
      %p85 = scmp.ne.s32.totalorder %s73, %s74
      %p86 = scmp.eq.s32.totalorder %s22, 1
      %p87 = por %p85, %p86
      %p89 = scmp.ne.s32.totalorder %s74, %s88
      %p90 = scmp.eq.s32.totalorder %s22, 0
      %p91 = por %p89, %p90
      %s93 = sadd.s32 %s92, 1
      %p96 = scmp.eq.s32.totalorder %s16, 1
      %p97 = scmp.ne.s32.totalorder %s92, %s94
      %p98 = scmp.eq.s32.totalorder %s16, 0
      %p99 = por %p97, %p98
      %p100 = scmp.ne.s32.totalorder %s92, %s94
      %p101 = scmp.eq.s32.totalorder %s21, 1
      %p102 = por %p100, %p101
      %p103 = scmp.ne.s32.totalorder %s94, %s95
      %p104 = scmp.eq.s32.totalorder %s21, 0
      %p105 = por %p103, %p104
      %p106 = scmp.ne.s32.totalorder %s94, %s95
      %p107 = scmp.eq.s32.totalorder %s22, 1
      %p108 = por %p106, %p107
      %p110 = scmp.ne.s32.totalorder %s95, %s109
      %p111 = scmp.eq.s32.totalorder %s22, 0
      %p112 = por %p110, %p111
      %s114 = sadd.s32 %s113, 1
      %p117 = scmp.eq.s32.totalorder %s16, 1
      %p118 = scmp.ne.s32.totalorder %s113, %s115
      %p119 = scmp.eq.s32.totalorder %s16, 0
      %p120 = por %p118, %p119
      %p121 = scmp.ne.s32.totalorder %s113, %s115
      %p122 = scmp.eq.s32.totalorder %s21, 1
      %p123 = por %p121, %p122
      %p124 = scmp.ne.s32.totalorder %s115, %s116
      %p125 = scmp.eq.s32.totalorder %s21, 0
      %p126 = por %p124, %p125
      %p127 = scmp.ne.s32.totalorder %s115, %s116
      %p128 = scmp.eq.s32.totalorder %s22, 1
      %p129 = por %p127, %p128
      %p131 = scmp.ne.s32.totalorder %s116, %s130
      %p132 = scmp.eq.s32.totalorder %s22, 0
      %p133 = por %p131, %p132
      %s135 = sadd.s32 %s134, 1
      %p138 = scmp.eq.s32.totalorder %s16, 1
      %p139 = scmp.ne.s32.totalorder %s134, %s136
      %p140 = scmp.eq.s32.totalorder %s16, 0
      %p141 = por %p139, %p140
      %p142 = scmp.ne.s32.totalorder %s134, %s136
      %p143 = scmp.eq.s32.totalorder %s21, 1
      %p144 = por %p142, %p143
      %p145 = scmp.ne.s32.totalorder %s136, %s137
      %p146 = scmp.eq.s32.totalorder %s21, 0
      %p147 = por %p145, %p146
      %p148 = scmp.ne.s32.totalorder %s136, %s137
      %p149 = scmp.eq.s32.totalorder %s22, 1
      %p150 = por %p148, %p149
      %p152 = scmp.ne.s32.totalorder %s137, %s151
      %p153 = scmp.eq.s32.totalorder %s22, 0
      %p154 = por %p152, %p153
      %s156 = sadd.s32 %s155, 1
      %p159 = scmp.eq.s32.totalorder %s16, 1
      %p160 = scmp.ne.s32.totalorder %s155, %s157
      %p161 = scmp.eq.s32.totalorder %s16, 0
      %p162 = por %p160, %p161
      %p163 = scmp.ne.s32.totalorder %s155, %s157
      %p164 = scmp.eq.s32.totalorder %s21, 1
      %p165 = por %p163, %p164
      %p166 = scmp.ne.s32.totalorder %s157, %s158
      %p167 = scmp.eq.s32.totalorder %s21, 0
      %p168 = por %p166, %p167
      %p169 = scmp.ne.s32.totalorder %s157, %s158
      %p170 = scmp.eq.s32.totalorder %s22, 1
      %p171 = por %p169, %p170
      %p173 = scmp.ne.s32.totalorder %s158, %s172
      %p174 = scmp.eq.s32.totalorder %s22, 0
      %p175 = por %p173, %p174
      %s176 = ssub.s32 %s16, %s23
      %p177 = scmp.eq.s32.totalorder %s176, 0
      %s179 = sadd.s32 %s178, 1
      %s180 = scalar_select %p177, %s178, %s179
      %p183 = pneg %p177
      %p184 = scmp.eq.s32.totalorder %s16, 1
      %p185 = por %p183, %p184
      %p186 = scmp.ne.s32.totalorder %s178, %s181
      %p187 = scmp.eq.s32.totalorder %s16, 0
      %p188 = por %p186, %p187
      %p189 = scmp.ne.s32.totalorder %s178, %s181
      %p190 = scmp.eq.s32.totalorder %s21, 1
      %p191 = por %p189, %p190
      %p192 = scmp.ne.s32.totalorder %s181, %s182
      %p193 = scmp.eq.s32.totalorder %s21, 0
      %p194 = por %p192, %p193
      %p195 = scmp.ne.s32.totalorder %s181, %s182
      %p196 = scmp.eq.s32.totalorder %s22, 1
      %p197 = por %p195, %p196
      %p199 = scmp.ne.s32.totalorder %s182, %s198
      %p200 = scmp.eq.s32.totalorder %s22, 0
      %p201 = por %p199, %p200
      %p202 = scmp.le.s32.totalorder 1, %s16
      %p203 = scmp.lt.s32.totalorder %s16, 3
      %p204 = pnand %p202, %p203
      %p205 = pneg %p204
      // Predicated region
      $region9: #{tpu_custom_call.1} parent=5 // pred_check
        _
      $region10: #{tpu_custom_call.1} parent=5 // pred_check_branch
        %207 = sbr.rel (%p204) target = $region12
      $region11: #{tpu_custom_call.1} parent=5 // pred_region
        %s208 = ssub.s32 %s16, 1
        // Predicated region
        $region13: #{tpu_custom_call.1} parent=11 // pred_check
          %p209 = pneg %p63
        $region14: #{tpu_custom_call.1} parent=11 // pred_check_branch
          %211 = sbr.rel (%p209) target = $region16
        $region15: #{tpu_custom_call.1} parent=11 // pred_region
          _
        $region16: #{tpu_custom_call.1} parent=11 // pred_fallthru
          _
        // Predicated region
        $region17: #{tpu_custom_call.1} parent=11 // pred_check
          %p212 = pneg %p84
        $region18: #{tpu_custom_call.1} parent=11 // pred_check_branch
          %214 = sbr.rel (%p212) target = $region20
        $region19: #{tpu_custom_call.1} parent=11 // pred_region
          _
        $region20: #{tpu_custom_call.1} parent=11 // pred_fallthru
          _
        // Predicated region
        $region21: #{tpu_custom_call.1} parent=11 // pred_check
          %p215 = pneg %p105
        $region22: #{tpu_custom_call.1} parent=11 // pred_check_branch
          %217 = sbr.rel (%p215) target = $region24
        $region23: #{tpu_custom_call.1} parent=11 // pred_region
          _
        $region24: #{tpu_custom_call.1} parent=11 // pred_fallthru
          _
        // Predicated region
        $region25: #{tpu_custom_call.1} parent=11 // pred_check
          %p218 = pneg %p126
        $region26: #{tpu_custom_call.1} parent=11 // pred_check_branch
          %220 = sbr.rel (%p218) target = $region28
        $region27: #{tpu_custom_call.1} parent=11 // pred_region
          _
        $region28: #{tpu_custom_call.1} parent=11 // pred_fallthru
          _
        // Predicated region
        $region29: #{tpu_custom_call.1} parent=11 // pred_check
          %p221 = pneg %p147
        $region30: #{tpu_custom_call.1} parent=11 // pred_check_branch
          %223 = sbr.rel (%p221) target = $region32
        $region31: #{tpu_custom_call.1} parent=11 // pred_region
          _
        $region32: #{tpu_custom_call.1} parent=11 // pred_fallthru
          _
        // Predicated region
        $region33: #{tpu_custom_call.1} parent=11 // pred_check
          %p224 = pneg %p168
        $region34: #{tpu_custom_call.1} parent=11 // pred_check_branch
          %226 = sbr.rel (%p224) target = $region36
        $region35: #{tpu_custom_call.1} parent=11 // pred_region
          _
        $region36: #{tpu_custom_call.1} parent=11 // pred_fallthru
          _
      $region12: #{tpu_custom_call.1} parent=5 // pred_fallthru
        _
      %p227 = scmp.lt.s32.totalorder %s16, 2
      // Predicated region
      $region37: #{tpu_custom_call.1} parent=5 // pred_check
        %p228 = pneg %p227
      $region38: #{tpu_custom_call.1} parent=5 // pred_check_branch
        %230 = sbr.rel (%p228) target = $region40
      $region39: #{tpu_custom_call.1} parent=5 // pred_region
        // Predicated region
        $region41: #{tpu_custom_call.1} parent=39 // pred_check
          %p231 = pneg %p36
        $region42: #{tpu_custom_call.1} parent=39 // pred_check_branch
          %233 = sbr.rel (%p231) target = $region44
        $region43: #{tpu_custom_call.1} parent=39 // pred_region
          %s234 = smul.u32 2, %s16
          %p235 = scmp.lt.s32.totalorder %s234, 3
          %s236 = scalar_select %p235, %s234, 3
          %s237 = smul.addr %s236, 4
          %s238 = scalar_lea.vmem %s0, %s237
          %s239 = smul.u32 2, %s16
        $region44: #{tpu_custom_call.1} parent=39 // pred_fallthru
          _
      $region40: #{tpu_custom_call.1} parent=5 // pred_fallthru
        _
      %p240 = scmp.le.s32.totalorder 1, %s16
      %p241 = scmp.lt.s32.totalorder %s16, 3
      %p242 = pnand %p240, %p241
      %p243 = pneg %p242
      // Predicated region
      $region45: #{tpu_custom_call.1} parent=5 // pred_check
        _
      $region46: #{tpu_custom_call.1} parent=5 // pred_check_branch
        %245 = sbr.rel (%p242) target = $region48
      $region47: #{tpu_custom_call.1} parent=5 // pred_region
        %s246 = ssub.s32 %s16, 1
        %s247 = smul.u32 2, %s21
        %p248 = scmp.lt.s32.totalorder %s247, 3
        %s249 = scalar_select %p248, %s247, 3
        %s250 = smul.addr %s249, 4
        %s251 = scalar_lea.vmem %s0, %s250
        %p252 = pneg %p42
        %p253 = pneg %p39
        %p254 = pneg %p63
        %p255 = pneg %p60
        %p256 = pneg %p84
        %p257 = pneg %p81
        %p258 = pneg %p105
        %p259 = pneg %p102
        %p260 = pneg %p126
        %p261 = pneg %p123
        %p262 = pneg %p147
        %p263 = pneg %p144
        %p264 = pneg %p168
        %p265 = pneg %p165
        %p266 = pneg %p194
        %p267 = pneg %p191
        %s268 = sand.u32 %s181, 1
        %s269 = scalar_lea.sflag [#allocation3], %s268
        %s270 = sand.u32 %s181, 1
        %s271 = smul.addr %s270, 16
        %s272 = scalar_lea.vmem [#allocation2], %s271
        %s273 = smul.u32 2, %s21
        %p274 = scmp.lt.s32.totalorder %s273, 3
        %s275 = scalar_select %p274, %s273, 3
        %s276 = smul.addr %s275, 4
        %s277 = scalar_lea.vmem %s0, %s276
        %s278 = smul.u32 2, %s21
        %s279 = smul.u32 2, %s21
        %v280 = vld [vmem:[%s277] sm:$0xf]
        %v281 = vld [vmem:[%s277 + $0x4] sm:$0xf]
        %v282 = vlaneseq
        %v283 = vand.u32 %v282, 127
        %284 = vrot.lane.b32.xlu0 %v280, 4
        %v285 = vpop.permute.xlu0 %284
        %286 = vrot.lane.b32.xlu0 %v281, 4
        %v287 = vpop.permute.xlu0 %286
        %vm288 = vcmp.ge.s32.totalorder %v283, 4
        %v289 = vsel %vm288, %v285, 0.0
        %v290 = vsel %vm288, %v287, 0.0
        %291 = vrot.lane.b32.xlu0 %v280, 2
        %v292 = vpop.permute.xlu0 %291
        %293 = vrot.lane.b32.xlu0 %v281, 2
        %v294 = vpop.permute.xlu0 %293
        %vm295 = vcmp.ge.s32.totalorder %v283, 2
        %v296 = vsel %vm295, %v292, 0.0
        %v297 = vsel %vm295, %v294, 0.0
        %v300 = vrot.slane %v296, 4
        %v301 = vrot.slane %v297, 4
        %vm304 = vcmask 1043456
        %v305 = vsel %vm304, %v289, %v300
        %v306 = vsel %vm304, %v290, %v301
        %v307 = vld [vmem:[%s1] sm:$0xff]
        %v308 = vld [vmem:[%s2] sm:$0xff]
        %310 = vset.pattern.permute.xlu0 0
        %311 = vperm.xlu0 %310, %v308
        %v312 = vpop.permute.xlu0 %311
        %vm314 = vcmask 97280
        %v316 = vsel %vm314, %v307, 0
        %v319 = vsel %vm304, %v280, 0
        %321 = vmatpush.msra.mxu0 0.0
        %322 = vmatpush.msra.mxu0 0.0
        %323 = vmatpush.msra.mxu0 0.0
        %324 = vmatpush.msra.mxu0 0.0
        %325 = vmatpush.msra.mxu0 0.0
        %326 = vmatpush.msra.mxu0 0.0
        %327 = vmatpush.msra.mxu0 0.0
        %328 = vmatpush.msra.mxu0 0.0
        %329 = vmatpush.msra.mxu0 0.0
        %330 = vmatpush.msra.mxu0 0.0
        %331 = vmatpush.msra.mxu0 0.0
        %332 = vmatpush.msra.mxu0 0.0
        %333 = vmatpush.msra.mxu0 0.0
        %334 = vmatpush.msra.mxu0 0.0
        %335 = vmatpush.msra.mxu0 %v319
        %336 = vmatpush.msra.mxu0 %v305
        %337 = vmatmul.f32.gmra.mxu0 %v316
        %v338 = vpop.f32.mrf.mxu0
        %v339 = vadd.f32 %v312, %v338
        %340 = vdwg.mxu0
        %v342 = vsel %vm304, %v281, 0
        %344 = vmatpush.msra.mxu0 0.0
        %345 = vmatpush.msra.mxu0 0.0
        %346 = vmatpush.msra.mxu0 0.0
        %347 = vmatpush.msra.mxu0 0.0
        %348 = vmatpush.msra.mxu0 0.0
        %349 = vmatpush.msra.mxu0 0.0
        %350 = vmatpush.msra.mxu0 0.0
        %351 = vmatpush.msra.mxu0 0.0
        %352 = vmatpush.msra.mxu0 0.0
        %353 = vmatpush.msra.mxu0 0.0
        %354 = vmatpush.msra.mxu0 0.0
        %355 = vmatpush.msra.mxu0 0.0
        %356 = vmatpush.msra.mxu0 0.0
        %357 = vmatpush.msra.mxu0 0.0
        %358 = vmatpush.msra.mxu0 %v342
        %359 = vmatpush.msra.mxu0 %v306
        %360 = vmatmul.f32.gmra.mxu0 %v316
        %v361 = vpop.f32.mrf.mxu0
        %v362 = vadd.f32 %v312, %v361
        %363 = vdwg.mxu0
        %v364 = vmax.f32 %v339, 0.0
        %v365 = vmax.f32 %v362, 0.0
        %366 = vrot.lane.b32.xlu0 %v364, 4
        %v367 = vpop.permute.xlu0 %366
        %368 = vrot.lane.b32.xlu0 %v365, 4
        %v369 = vpop.permute.xlu0 %368
        %v370 = vsel %vm288, %v367, 0.0
        %v371 = vsel %vm288, %v369, 0.0
        %372 = vrot.lane.b32.xlu0 %v364, 2
        %v373 = vpop.permute.xlu0 %372
        %374 = vrot.lane.b32.xlu0 %v365, 2
        %v375 = vpop.permute.xlu0 %374
        %v376 = vsel %vm295, %v373, 0.0
        %v377 = vsel %vm295, %v375, 0.0
        %v378 = vld [vmem:[%s3] sm:$0xff]
        %v379 = vld [vmem:[%s4] sm:$0xff]
        %381 = vset.pattern.permute.xlu0 0
        %382 = vperm.xlu0 %381, %v379
        %v383 = vpop.permute.xlu0 %382
        %vm385 = vcmask 195584
        %v387 = vsel %vm385, %v378, 0
        %389 = vmatpush.msra.mxu0 0.0
        %390 = vmatpush.msra.mxu0 0.0
        %391 = vmatpush.msra.mxu0 0.0
        %392 = vmatpush.msra.mxu0 0.0
        %393 = vmatpush.msra.mxu0 0.0
        %394 = vmatpush.msra.mxu0 0.0
        %395 = vmatpush.msra.mxu0 0.0
        %396 = vmatpush.msra.mxu0 0.0
        %397 = vmatpush.msra.mxu0 0.0
        %398 = vmatpush.msra.mxu0 0.0
        %399 = vmatpush.msra.mxu0 0.0
        %400 = vmatpush.msra.mxu0 0.0
        %401 = vmatpush.msra.mxu0 0.0
        %402 = vmatpush.msra.mxu0 %v364
        %403 = vmatpush.msra.mxu0 %v376
        %404 = vmatpush.msra.mxu0 %v370
        %405 = vmatmul.f32.gmra.mxu0 %v387
        %v406 = vpop.f32.mrf.mxu0
        %v407 = vadd.f32 %v383, %v406
        %408 = vdwg.mxu0
        %409 = vmatpush.msra.mxu0 0.0
        %410 = vmatpush.msra.mxu0 0.0
        %411 = vmatpush.msra.mxu0 0.0
        %412 = vmatpush.msra.mxu0 0.0
        %413 = vmatpush.msra.mxu0 0.0
        %414 = vmatpush.msra.mxu0 0.0
        %415 = vmatpush.msra.mxu0 0.0
        %416 = vmatpush.msra.mxu0 0.0
        %417 = vmatpush.msra.mxu0 0.0
        %418 = vmatpush.msra.mxu0 0.0
        %419 = vmatpush.msra.mxu0 0.0
        %420 = vmatpush.msra.mxu0 0.0
        %421 = vmatpush.msra.mxu0 0.0
        %422 = vmatpush.msra.mxu0 %v365
        %423 = vmatpush.msra.mxu0 %v377
        %424 = vmatpush.msra.mxu0 %v371
        %425 = vmatmul.f32.gmra.mxu0 %v387
        %v426 = vpop.f32.mrf.mxu0
        %v427 = vadd.f32 %v383, %v426
        %428 = vdwg.mxu0
        %v429 = vmax.f32 %v407, 0.0
        %v430 = vmax.f32 %v427, 0.0
        %v431 = vld [vmem:[%s5] sm:$0xff]
        %v432 = vld [vmem:[%s6] sm:$0xff]
        %434 = vset.pattern.permute.xlu0 0
        %435 = vperm.xlu0 %434, %v432
        %v436 = vpop.permute.xlu0 %435
        %vm438 = vcmask 31744
        %v440 = vsel %vm438, %v431, 0
        %442 = vmatpush.msra.mxu0 0.0
        %443 = vmatpush.msra.mxu0 0.0
        %444 = vmatpush.msra.mxu0 0.0
        %445 = vmatpush.msra.mxu0 0.0
        %446 = vmatpush.msra.mxu0 0.0
        %447 = vmatpush.msra.mxu0 0.0
        %448 = vmatpush.msra.mxu0 0.0
        %449 = vmatpush.msra.mxu0 0.0
        %450 = vmatpush.msra.mxu0 0.0
        %451 = vmatpush.msra.mxu0 0.0
        %452 = vmatpush.msra.mxu0 0.0
        %453 = vmatpush.msra.mxu0 0.0
        %454 = vmatpush.msra.mxu0 0.0
        %455 = vmatpush.msra.mxu0 0.0
        %456 = vmatpush.msra.mxu0 0.0
        %457 = vmatpush.msra.mxu0 %v319
        %458 = vmatmul.f32.gmra.mxu0 %v440
        %v459 = vpop.f32.mrf.mxu0
        %v460 = vadd.f32 %v436, %v459
        %461 = vdwg.mxu0
        %462 = vmatpush.msra.mxu0 0.0
        %463 = vmatpush.msra.mxu0 0.0
        %464 = vmatpush.msra.mxu0 0.0
        %465 = vmatpush.msra.mxu0 0.0
        %466 = vmatpush.msra.mxu0 0.0
        %467 = vmatpush.msra.mxu0 0.0
        %468 = vmatpush.msra.mxu0 0.0
        %469 = vmatpush.msra.mxu0 0.0
        %470 = vmatpush.msra.mxu0 0.0
        %471 = vmatpush.msra.mxu0 0.0
        %472 = vmatpush.msra.mxu0 0.0
        %473 = vmatpush.msra.mxu0 0.0
        %474 = vmatpush.msra.mxu0 0.0
        %475 = vmatpush.msra.mxu0 0.0
        %476 = vmatpush.msra.mxu0 0.0
        %477 = vmatpush.msra.mxu0 %v342
        %478 = vmatmul.f32.gmra.mxu0 %v440
        %v479 = vpop.f32.mrf.mxu0
        %v480 = vadd.f32 %v436, %v479
        %481 = vdwg.mxu0
        %v482 = vadd.f32 %v429, %v460
        %v483 = vadd.f32 %v430, %v480
        %v484 = vmax.f32 %v482, 0.0
        %v485 = vmax.f32 %v483, 0.0
        %486 = vst [vmem:[%s272] sm:$0xff] %v484
        %487 = vst [vmem:[%s272 + $0x8] sm:$0xff] %v485
        %s488 = sand.u32 %s181, 1
        %s489 = scalar_lea.sflag [#allocation3], %s488
        %s490 = sand.u32 %s181, 1
        %s491 = smul.addr %s490, 16
        %s492 = scalar_lea.vmem [#allocation2], %s491
        // Predicated region
        $region49: #{tpu_custom_call.1} parent=47 // pred_check
          %p493 = pneg %p191
        $region50: #{tpu_custom_call.1} parent=47 // pred_check_branch
          %495 = sbr.rel (%p493) target = $region52
        $region51: #{tpu_custom_call.1} parent=47 // pred_region
          %s496 = smul.u32 2, %s21
          %498 = vsyncadd %s489, 0
          %s499 = smul.addr %s496, 8
          %s500 = scalar_lea.hbm %s7, %s499
          %s501 = sshll.u32 %s492, 4
          %s502 = int_to_ptr.vmem [resolvable:$true] %s501
          %s503 = sshll.u32 %s500, 4
          %s504 = int_to_ptr.hbm [resolvable:$true] %s503
          %509 = dma.vmem_to_hbm [thread:$0]  %s502, 256, %s504, %s489, 128, 128, 8
        $region52: #{tpu_custom_call.1} parent=47 // pred_fallthru
          _
      $region48: #{tpu_custom_call.1} parent=5 // pred_fallthru
        _
      %p510 = scmp.le.s32.totalorder 2, %s16
      // Predicated region
      $region53: #{tpu_custom_call.1} parent=5 // pred_check
        %p511 = pneg %p510
      $region54: #{tpu_custom_call.1} parent=5 // pred_check_branch
        %513 = sbr.rel (%p511) target = $region56
      $region55: #{tpu_custom_call.1} parent=5 // pred_region
        %s514 = ssub.s32 %s16, 2
        // Predicated region
        $region57: #{tpu_custom_call.1} parent=55 // pred_check
          %p515 = pneg %p197
        $region58: #{tpu_custom_call.1} parent=55 // pred_check_branch
          %517 = sbr.rel (%p515) target = $region60
        $region59: #{tpu_custom_call.1} parent=55 // pred_region
          %s518 = sand.u32 %s182, 1
          %s519 = scalar_lea.sflag [#allocation3], %s518
          %s520 = sand.u32 %s182, 1
          %s521 = smul.addr %s520, 16
          %s522 = scalar_lea.vmem [#allocation2], %s521
          %524 = dma.done %s519, 256
        $region60: #{tpu_custom_call.1} parent=55 // pred_fallthru
          _
      $region56: #{tpu_custom_call.1} parent=5 // pred_fallthru
        _
    $region6: #{tpu_custom_call.1} parent=1 // loop_footer
      %s20 = sadd.s32 1, %s16
    $region7: #{tpu_custom_call.1} parent=1 // loop_footer_branch
      %15 = sbr.rel target = $region3
    $region8: #{tpu_custom_call.1} parent=1 // loop_exit
      _
    %525 = vsyncpa [#allocation3], 1
    %s526 = scalar_lea.sflag [#allocation3], 1
    %527 = vsyncpa %s526, 1

</llo_original>
